<compile_context>
chip_gen: v7x
topology: tpu7x:2x2x1
jax: 0.10.0
libtpu: 0.0.40
codegen_flags: <defaults>
</compile_context>

<pallas_src>
import functools

import jax
import jax.numpy as jnp
from jax.experimental import pallas as pl
from jax.experimental.pallas import tpu as pltpu


# ----------------------------- Pallas kernel ------------------------------- #

def _make_fused_kernel(n_hidden):
    """Builds a kernel fusing n_hidden (conv+BN+LeakyReLU) layers + final conv.

    Ref order: x_ref, [w_0, b_0, w_1, b_1, ..., w_{n-1}, b_{n-1}], w_final, o_ref
      x_ref : (1, Cin0, tile_s)        current spatial tile of one batch item
      w_i   : (Cout_i, Cin_i)          conv weight with BN scale pre-folded
      b_i   : (Cout_i, 1)              folded BN bias
      w_f   : (CoutF, Cin_last)        final conv weight
      o_ref : (1, CoutF, tile_s)
    """

    def kernel(*refs):
        x_ref = refs[0]
        o_ref = refs[-1]
        p = refs[1:-1]

        h = x_ref[0].astype(jnp.float32)                       # (Cin0, tile_s)
        for i in range(n_hidden):
            w = p[2 * i][...]                                  # (Cout, Cin)
            b = p[2 * i + 1][...]                              # (Cout, 1)
            h = jnp.dot(w, h, preferred_element_type=jnp.float32) + b
            h = jnp.where(h > 0.0, h, 0.1 * h)                 # LeakyReLU(0.1)
        wf = p[-1][...]                                        # (CoutF, Cin)
        y = jnp.dot(wf, h, preferred_element_type=jnp.float32)
        o_ref[0] = y.astype(o_ref.dtype)                       # lane-dense store

    return kernel


# ------------------------------ host wrapper ------------------------------- #

def _choose_tile(hw_padded, cap=2048):
    """Largest divisor of hw_padded that is a multiple of 128 and <= cap."""
    best = 128
    t = 128
    while t <= min(hw_padded, cap):
        if hw_padded % t == 0:
            best = t
        t += 128
    return best


def point_classifier_forward(x_nchw, params, dims):
    """x_nchw: (N, C, H, W) with C == dims[0]. Returns (N, dims[-1], H, W)."""
    N, C, H, W = x_nchw.shape
    assert C == dims[0]
    HW = H * W
    HWp = ((HW + 127) // 128) * 128

    # NCHW -> (N, C, H*W): a pure reshape (no transpose / data movement).
    x3 = x_nchw.reshape(N, C, HW)
    if HWp != HW:
        x3 = jnp.pad(x3, ((0, 0), (0, 0), (0, HWp - HW)))

    tile_s = _choose_tile(HWp)
    n_hidden = len(params["hidden"])
    cof = params["final_w"].shape[0]

    in_specs = [pl.BlockSpec((1, C, tile_s), lambda n, s: (n, 0, s))]
    args = [x3]
    for (w, b) in params["hidden"]:
        co, ci = w.shape
        in_specs.append(pl.BlockSpec((co, ci), lambda n, s: (0, 0)))
        in_specs.append(pl.BlockSpec((co, 1), lambda n, s: (0, 0)))
        args += [w, b]
    in_specs.append(
        pl.BlockSpec(params["final_w"].shape, lambda n, s: (0, 0)))
    args.append(params["final_w"])

    out = pl.pallas_call(
        _make_fused_kernel(n_hidden),
        out_shape=jax.ShapeDtypeStruct((N, cof, HWp), x_nchw.dtype),
        grid_spec=pltpu.PrefetchScalarGridSpec(
            num_scalar_prefetch=0,
            grid=(N, HWp // tile_s),
            in_specs=in_specs,
            out_specs=pl.BlockSpec((1, cof, tile_s), lambda n, s: (n, 0, s)),
        ),
        compiler_params=pltpu.CompilerParams(
            dimension_semantics=("parallel", "parallel")),
    )(*args)

    # (N, CoutF, HWp) -> (N, CoutF, H, W): slice padding + pure reshape.
    return out[:, :, :HW].reshape(N, cof, H, W)


# ------------------------------ parameter init ----------------------------- #

def init_point_classifier_params(key, dims, eps=1e-5):
    """Deterministic synthetic parameters matching PointClassifier(dims).

    Conv weights are kept in PyTorch (Cout, Cin) layout. BatchNorm is folded:
    the per-channel scale (gamma / sqrt(var + eps)) is multiplied into the
    conv weight rows; only the bias (beta - mean * scale) remains.
    """
    hidden = []
    n_hidden = len(dims) - 2
    for i in range(n_hidden):
        cin, cout = dims[i], dims[i + 1]
        key, kw, kg, kb, km, kv = jax.random.split(key, 6)
        w = jax.random.normal(kw, (cout, cin), jnp.float32) * 0.1
        gamma = 1.0 + 0.1 * jax.random.normal(kg, (cout,), jnp.float32)
        beta = 0.1 * jax.random.normal(kb, (cout,), jnp.float32)
        running_mean = 0.1 * jax.random.normal(km, (cout,), jnp.float32)
        running_var = 1.0 + 0.1 * jax.random.uniform(kv, (cout,), jnp.float32)
        scale = gamma / jnp.sqrt(running_var + eps)
        w_folded = w * scale[:, None]
        bias = (beta - running_mean * scale).reshape(cout, 1)
        hidden.append((w_folded, bias))
    cin, cout = dims[-2], dims[-1]
    key, kw = jax.random.split(key)
    final_w = jax.random.normal(kw, (cout, cin), jnp.float32) * 0.1
    return {"hidden": hidden, "final_w": final_w}


# ------------------------------ plain-JAX reference ------------------------ #

def point_classifier_reference(x_nchw, params):
    N, C, H, W = x_nchw.shape
    h = x_nchw.reshape(N, C, H * W).astype(jnp.float32)
    for (w, b) in params["hidden"]:
        h = jnp.einsum("oc,ncs->nos", w, h) + b[None]
        h = jnp.where(h > 0.0, h, 0.1 * h)
    wf = params["final_w"]
    y = jnp.einsum("oc,ncs->nos", wf, h)
    return y.reshape(N, wf.shape[0], H, W)


# ----------------------------------- main ----------------------------------- #

if __name__ == "__main__":
    # dims = [in_ch, hidden, hidden, n_classes]
    dims = [4, 32, 32, 5]
    N, H, W = 2, 16, 16  # H*W = 256 (multiple of 128), grid = (2, 1)

    key = jax.random.PRNGKey(0)
    key, k_x = jax.random.split(key)
    x = jax.random.normal(k_x, (N, dims[0], H, W), jnp.float32)

    params = init_point_classifier_params(key, dims)

    fwd = jax.jit(functools.partial(point_classifier_forward, dims=dims))
    out = fwd(x, params)
    jax.block_until_ready(out)

    assert out.shape == (N, dims[-1], H, W), out.shape

    ref = point_classifier_reference(x, params)
    assert jnp.allclose(out, ref, atol=1e-4, rtol=1e-4), float(
        jnp.max(jnp.abs(out - ref)))

    print("KERNEL_OK")
</pallas_src>

<mosaic_0001>
module attributes {stable_mosaic.version = 11 : i64} {
  func.func @kernel(%arg0: i32, %arg1: i32, %arg2: memref<1x4x256xf32, #tpu.memory_space<vmem>>, %arg3: memref<32x4xf32, #tpu.memory_space<vmem>>, %arg4: memref<32x1xf32, #tpu.memory_space<vmem>>, %arg5: memref<32x32xf32, #tpu.memory_space<vmem>>, %arg6: memref<32x1xf32, #tpu.memory_space<vmem>>, %arg7: memref<5x32xf32, #tpu.memory_space<vmem>>, %arg8: memref<1x5x256xf32, #tpu.memory_space<vmem>>) attributes {dimension_semantics = [#tpu.dimension_semantics<parallel>, #tpu.dimension_semantics<parallel>], iteration_bounds = array<i64: 2, 1>, scalar_prefetch = 0 : i64, scratch_operands = 0 : i64, tpu.core_type = #tpu.core_type<tc>, window_params = [{transform_indices = @transform_0, window_bounds = array<i64: 1, 4, 256>}, {pipeline_mode = #tpu.pipeline_mode<synchronous>, transform_indices = @transform_1, window_bounds = array<i64: 32, 4>}, {pipeline_mode = #tpu.pipeline_mode<synchronous>, transform_indices = @transform_2, window_bounds = array<i64: 32, 1>}, {pipeline_mode = #tpu.pipeline_mode<synchronous>, transform_indices = @transform_3, window_bounds = array<i64: 32, 32>}, {pipeline_mode = #tpu.pipeline_mode<synchronous>, transform_indices = @transform_4, window_bounds = array<i64: 32, 1>}, {pipeline_mode = #tpu.pipeline_mode<synchronous>, transform_indices = @transform_5, window_bounds = array<i64: 5, 32>}, {transform_indices = @transform_6, window_bounds = array<i64: 1, 5, 256>}]} {
    %c0 = arith.constant 0 : index
    %c0_0 = arith.constant 0 : index
    %c0_1 = arith.constant 0 : index
    %0 = vector.load %arg2[%c0, %c0_0, %c0_1] : memref<1x4x256xf32, #tpu.memory_space<vmem>>, vector<1x4x256xf32>
    %1 = vector.shape_cast %0 : vector<1x4x256xf32> to vector<4x256xf32>
    %c0_2 = arith.constant 0 : index
    %c0_3 = arith.constant 0 : index
    %2 = vector.load %arg3[%c0_2, %c0_3] : memref<32x4xf32, #tpu.memory_space<vmem>>, vector<32x4xf32>
    %c0_4 = arith.constant 0 : index
    %c0_5 = arith.constant 0 : index
    %3 = vector.load %arg4[%c0_4, %c0_5] : memref<32x1xf32, #tpu.memory_space<vmem>>, vector<32x1xf32>
    %cst = arith.constant dense<0.000000e+00> : vector<32x256xf32>
    %4 = tpu.matmul %2, %1, %cst {dimension_numbers = #tpu.dot_dimension_numbers<[1], [0], [0], [1], [0, 0, 1, 1], [], []>} : vector<32x4xf32>, vector<4x256xf32>, vector<32x256xf32> -> vector<32x256xf32>
    %5 = vector.broadcast %3 : vector<32x1xf32> to vector<32x256xf32>
    %6 = arith.addf %4, %5 : vector<32x256xf32>
    %cst_6 = arith.constant 0.000000e+00 : f32
    %7 = vector.broadcast %cst_6 : f32 to vector<32x256xf32>
    %8 = arith.cmpf ogt, %6, %7 : vector<32x256xf32>
    %cst_7 = arith.constant 1.000000e-01 : f32
    %9 = vector.broadcast %cst_7 : f32 to vector<32x256xf32>
    %10 = arith.mulf %9, %6 : vector<32x256xf32>
    %11 = arith.select %8, %6, %10 : vector<32x256xi1>, vector<32x256xf32>
    %c0_8 = arith.constant 0 : index
    %c0_9 = arith.constant 0 : index
    %12 = vector.load %arg5[%c0_8, %c0_9] : memref<32x32xf32, #tpu.memory_space<vmem>>, vector<32x32xf32>
    %c0_10 = arith.constant 0 : index
    %c0_11 = arith.constant 0 : index
    %13 = vector.load %arg6[%c0_10, %c0_11] : memref<32x1xf32, #tpu.memory_space<vmem>>, vector<32x1xf32>
    %cst_12 = arith.constant dense<0.000000e+00> : vector<32x256xf32>
    %14 = tpu.matmul %12, %11, %cst_12 {dimension_numbers = #tpu.dot_dimension_numbers<[1], [0], [0], [1], [0, 0, 1, 1], [], []>} : vector<32x32xf32>, vector<32x256xf32>, vector<32x256xf32> -> vector<32x256xf32>
    %15 = vector.broadcast %13 : vector<32x1xf32> to vector<32x256xf32>
    %16 = arith.addf %14, %15 : vector<32x256xf32>
    %cst_13 = arith.constant 0.000000e+00 : f32
    %17 = vector.broadcast %cst_13 : f32 to vector<32x256xf32>
    %18 = arith.cmpf ogt, %16, %17 : vector<32x256xf32>
    %cst_14 = arith.constant 1.000000e-01 : f32
    %19 = vector.broadcast %cst_14 : f32 to vector<32x256xf32>
    %20 = arith.mulf %19, %16 : vector<32x256xf32>
    %21 = arith.select %18, %16, %20 : vector<32x256xi1>, vector<32x256xf32>
    %c0_15 = arith.constant 0 : index
    %c0_16 = arith.constant 0 : index
    %22 = vector.load %arg7[%c0_15, %c0_16] : memref<5x32xf32, #tpu.memory_space<vmem>>, vector<5x32xf32>
    %cst_17 = arith.constant dense<0.000000e+00> : vector<5x256xf32>
    %23 = tpu.matmul %22, %21, %cst_17 {dimension_numbers = #tpu.dot_dimension_numbers<[1], [0], [0], [1], [0, 0, 1, 1], [], []>} : vector<5x32xf32>, vector<32x256xf32>, vector<5x256xf32> -> vector<5x256xf32>
    %c0_18 = arith.constant 0 : index
    %c0_19 = arith.constant 0 : index
    %c0_20 = arith.constant 0 : index
    %24 = vector.load %arg8[%c0_18, %c0_19, %c0_20] : memref<1x5x256xf32, #tpu.memory_space<vmem>>, vector<1x5x256xf32>
    %25 = vector.shape_cast %24 : vector<1x5x256xf32> to vector<5x256xf32>
    %26 = vector.shape_cast %23 : vector<5x256xf32> to vector<1x5x256xf32>
    tpu.vector_store %arg8[%c0_18, %c0_19, %c0_20], %26 {strides = array<i32>} : memref<1x5x256xf32, #tpu.memory_space<vmem>>, vector<1x5x256xf32>,
    return
  }
  func.func @transform_0(%arg0: i32, %arg1: i32) -> (i32, i32, i32) {
    %c0_i32 = arith.constant 0 : i32
    %c0_i32_0 = arith.constant 0 : i32
    return %arg0, %c0_i32, %arg1 : i32, i32, i32
  }
  func.func @transform_1(%arg0: i32, %arg1: i32) -> (i32, i32) {
    %c0_i32 = arith.constant 0 : i32
    %c0_i32_0 = arith.constant 0 : i32
    %c0_i32_1 = arith.constant 0 : i32
    return %c0_i32, %c0_i32_0 : i32, i32
  }
  func.func @transform_2(%arg0: i32, %arg1: i32) -> (i32, i32) {
    %c0_i32 = arith.constant 0 : i32
    %c0_i32_0 = arith.constant 0 : i32
    %c0_i32_1 = arith.constant 0 : i32
    return %c0_i32, %c0_i32_0 : i32, i32
  }
  func.func @transform_3(%arg0: i32, %arg1: i32) -> (i32, i32) {
    %c0_i32 = arith.constant 0 : i32
    %c0_i32_0 = arith.constant 0 : i32
    %c0_i32_1 = arith.constant 0 : i32
    return %c0_i32, %c0_i32_0 : i32, i32
  }
  func.func @transform_4(%arg0: i32, %arg1: i32) -> (i32, i32) {
    %c0_i32 = arith.constant 0 : i32
    %c0_i32_0 = arith.constant 0 : i32
    %c0_i32_1 = arith.constant 0 : i32
    return %c0_i32, %c0_i32_0 : i32, i32
  }
  func.func @transform_5(%arg0: i32, %arg1: i32) -> (i32, i32) {
    %c0_i32 = arith.constant 0 : i32
    %c0_i32_0 = arith.constant 0 : i32
    %c0_i32_1 = arith.constant 0 : i32
    return %c0_i32, %c0_i32_0 : i32, i32
  }
  func.func @transform_6(%arg0: i32, %arg1: i32) -> (i32, i32, i32) {
    %c0_i32 = arith.constant 0 : i32
    %c0_i32_0 = arith.constant 0 : i32
    return %arg0, %c0_i32, %arg1 : i32, i32, i32
  }
}

</mosaic_0001>

<llo_original>
// kernel: point_classifier_forward.1
$region0: #{point_classifier_forward.1}
  #allocation0 [shape = 'u32[]', space=smem, size = 0x4, offset = 0x4, fixed_abs, tag = 'smem constant byte address 0x4 - core index']
  #allocation1 [shape = 'u32[144,128]{1,0:T(1,128)}', space=vmem, size = 0x12000, scoped, tag = 'internal scratch']
  %s0 = inlined_call_operand.vmem [shape: f32[2,4,256], index: 0, kind: input, shape index: {}]
  %s1 = inlined_call_operand.vmem [shape: f32[32,4], index: 1, kind: input, shape index: {}]
  %s2 = inlined_call_operand.vmem [shape: f32[32,1], index: 2, kind: input, shape index: {}]
  %s3 = inlined_call_operand.vmem [shape: f32[32,32], index: 3, kind: input, shape index: {}]
  %s4 = inlined_call_operand.vmem [shape: f32[32,1], index: 4, kind: input, shape index: {}]
  %s5 = inlined_call_operand.vmem [shape: f32[5,32], index: 5, kind: input, shape index: {}]
  %s6 = inlined_call_operand.vmem [shape: f32[2,5,256], index: 6, kind: output, shape index: {}]
  %s7 = sld [smem:[#allocation0]]
  $region57: #{point_classifier_forward.1} parent=0
    _
  %s9 = ssub.s32 1, %s7
  %s10 = scalar_select 0, %s9, %s7
  loop: start=0, step=1, limit=4
  $region2: #{point_classifier_forward.1} parent=0 // loop_pre_header
    _
  $region3: #{point_classifier_forward.1} parent=0 // loop_header
    %s12 = sphi 0, %s16
    %p13 = scmp.ge.s32.totalorder %s12, 4
    %s19 = sphi 0, %s31
    %s20 = sphi 0, %s27
    %s21 = sphi 0, %s19
    %s22 = sphi 0, %s20
    %s23 = sphi 0, %s21
    %s24 = sphi 0, %s22
    %s36 = sphi 0, %s38
    %s39 = sphi 0, %s36
    %s40 = sphi 0, %s39
    %s56 = sphi 0, %s40
    %s60 = sphi 0, %s60
    %s62 = sphi 0, %s60
    %s63 = sphi 0, %s62
    %s77 = sphi 0, %s63
    %s81 = sphi 0, %s81
    %s83 = sphi 0, %s81
    %s84 = sphi 0, %s83
    %s98 = sphi 0, %s84
    %s102 = sphi 0, %s102
    %s104 = sphi 0, %s102
    %s105 = sphi 0, %s104
    %s119 = sphi 0, %s105
    %s123 = sphi 0, %s123
    %s125 = sphi 0, %s123
    %s126 = sphi 0, %s125
    %s140 = sphi 0, %s126
    %s144 = sphi 0, %s144
    %s146 = sphi 0, %s144
    %s147 = sphi 0, %s146
    %s161 = sphi 0, %s147
    %s169 = sphi 0, %s171
    %s172 = sphi 0, %s169
    %s173 = sphi 0, %s172
    %s189 = sphi 0, %s173
  $region4: #{point_classifier_forward.1} parent=0 // loop_header_branch
    %15 = sbr.rel (%p13) target = $region8
  $region5: #{point_classifier_forward.1} parent=0 // loop_body
    %s17 = ssub.s32 %s12, 1
    %s18 = ssub.s32 %s12, 2
    %s25 = sadd.s32 1, %s20
    %p26 = scmp.ge.s32.totalorder %s25, 1
    %s27 = scalar_select %p26, 0, %s25
    %s28 = sadd.s32 1, %s19
    %s29 = scalar_select %p26, %s28, %s19
    %p30 = scmp.ge.s32.totalorder %s29, 2
    %s31 = scalar_select %p30, 0, %s29
    %s32 = ssub.s32 %s19, %s31
    %s33 = ssub.s32 %s20, %s27
    %s34 = sor.u32 %s32, %s33
    %p35 = scmp.eq.s32.totalorder %s34, 0
    %s37 = sadd.s32 %s36, 1
    %s38 = scalar_select %p35, %s36, %s37
    %p41 = pneg %p35
    %p42 = scmp.eq.s32.totalorder %s12, 1
    %p43 = por %p41, %p42
    %p44 = scmp.ne.s32.totalorder %s36, %s39
    %p45 = scmp.eq.s32.totalorder %s12, 0
    %p46 = por %p44, %p45
    %p47 = scmp.ne.s32.totalorder %s36, %s39
    %p48 = scmp.eq.s32.totalorder %s17, 1
    %p49 = por %p47, %p48
    %p50 = scmp.ne.s32.totalorder %s39, %s40
    %p51 = scmp.eq.s32.totalorder %s17, 0
    %p52 = por %p50, %p51
    %p53 = scmp.ne.s32.totalorder %s39, %s40
    %p54 = scmp.eq.s32.totalorder %s18, 1
    %p55 = por %p53, %p54
    %p57 = scmp.ne.s32.totalorder %s40, %s56
    %p58 = scmp.eq.s32.totalorder %s18, 0
    %p59 = por %p57, %p58
    %s61 = sadd.s32 %s60, 1
    %p64 = scmp.eq.s32.totalorder %s12, 1
    %p65 = scmp.ne.s32.totalorder %s60, %s62
    %p66 = scmp.eq.s32.totalorder %s12, 0
    %p67 = por %p65, %p66
    %p68 = scmp.ne.s32.totalorder %s60, %s62
    %p69 = scmp.eq.s32.totalorder %s17, 1
    %p70 = por %p68, %p69
    %p71 = scmp.ne.s32.totalorder %s62, %s63
    %p72 = scmp.eq.s32.totalorder %s17, 0
    %p73 = por %p71, %p72
    %p74 = scmp.ne.s32.totalorder %s62, %s63
    %p75 = scmp.eq.s32.totalorder %s18, 1
    %p76 = por %p74, %p75
    %p78 = scmp.ne.s32.totalorder %s63, %s77
    %p79 = scmp.eq.s32.totalorder %s18, 0
    %p80 = por %p78, %p79
    %s82 = sadd.s32 %s81, 1
    %p85 = scmp.eq.s32.totalorder %s12, 1
    %p86 = scmp.ne.s32.totalorder %s81, %s83
    %p87 = scmp.eq.s32.totalorder %s12, 0
    %p88 = por %p86, %p87
    %p89 = scmp.ne.s32.totalorder %s81, %s83
    %p90 = scmp.eq.s32.totalorder %s17, 1
    %p91 = por %p89, %p90
    %p92 = scmp.ne.s32.totalorder %s83, %s84
    %p93 = scmp.eq.s32.totalorder %s17, 0
    %p94 = por %p92, %p93
    %p95 = scmp.ne.s32.totalorder %s83, %s84
    %p96 = scmp.eq.s32.totalorder %s18, 1
    %p97 = por %p95, %p96
    %p99 = scmp.ne.s32.totalorder %s84, %s98
    %p100 = scmp.eq.s32.totalorder %s18, 0
    %p101 = por %p99, %p100
    %s103 = sadd.s32 %s102, 1
    %p106 = scmp.eq.s32.totalorder %s12, 1
    %p107 = scmp.ne.s32.totalorder %s102, %s104
    %p108 = scmp.eq.s32.totalorder %s12, 0
    %p109 = por %p107, %p108
    %p110 = scmp.ne.s32.totalorder %s102, %s104
    %p111 = scmp.eq.s32.totalorder %s17, 1
    %p112 = por %p110, %p111
    %p113 = scmp.ne.s32.totalorder %s104, %s105
    %p114 = scmp.eq.s32.totalorder %s17, 0
    %p115 = por %p113, %p114
    %p116 = scmp.ne.s32.totalorder %s104, %s105
    %p117 = scmp.eq.s32.totalorder %s18, 1
    %p118 = por %p116, %p117
    %p120 = scmp.ne.s32.totalorder %s105, %s119
    %p121 = scmp.eq.s32.totalorder %s18, 0
    %p122 = por %p120, %p121
    %s124 = sadd.s32 %s123, 1
    %p127 = scmp.eq.s32.totalorder %s12, 1
    %p128 = scmp.ne.s32.totalorder %s123, %s125
    %p129 = scmp.eq.s32.totalorder %s12, 0
    %p130 = por %p128, %p129
    %p131 = scmp.ne.s32.totalorder %s123, %s125
    %p132 = scmp.eq.s32.totalorder %s17, 1
    %p133 = por %p131, %p132
    %p134 = scmp.ne.s32.totalorder %s125, %s126
    %p135 = scmp.eq.s32.totalorder %s17, 0
    %p136 = por %p134, %p135
    %p137 = scmp.ne.s32.totalorder %s125, %s126
    %p138 = scmp.eq.s32.totalorder %s18, 1
    %p139 = por %p137, %p138
    %p141 = scmp.ne.s32.totalorder %s126, %s140
    %p142 = scmp.eq.s32.totalorder %s18, 0
    %p143 = por %p141, %p142
    %s145 = sadd.s32 %s144, 1
    %p148 = scmp.eq.s32.totalorder %s12, 1
    %p149 = scmp.ne.s32.totalorder %s144, %s146
    %p150 = scmp.eq.s32.totalorder %s12, 0
    %p151 = por %p149, %p150
    %p152 = scmp.ne.s32.totalorder %s144, %s146
    %p153 = scmp.eq.s32.totalorder %s17, 1
    %p154 = por %p152, %p153
    %p155 = scmp.ne.s32.totalorder %s146, %s147
    %p156 = scmp.eq.s32.totalorder %s17, 0
    %p157 = por %p155, %p156
    %p158 = scmp.ne.s32.totalorder %s146, %s147
    %p159 = scmp.eq.s32.totalorder %s18, 1
    %p160 = por %p158, %p159
    %p162 = scmp.ne.s32.totalorder %s147, %s161
    %p163 = scmp.eq.s32.totalorder %s18, 0
    %p164 = por %p162, %p163
    %s165 = ssub.s32 %s19, %s31
    %s166 = ssub.s32 %s20, %s27
    %s167 = sor.u32 %s165, %s166
    %p168 = scmp.eq.s32.totalorder %s167, 0
    %s170 = sadd.s32 %s169, 1
    %s171 = scalar_select %p168, %s169, %s170
    %p174 = pneg %p168
    %p175 = scmp.eq.s32.totalorder %s12, 1
    %p176 = por %p174, %p175
    %p177 = scmp.ne.s32.totalorder %s169, %s172
    %p178 = scmp.eq.s32.totalorder %s12, 0
    %p179 = por %p177, %p178
    %p180 = scmp.ne.s32.totalorder %s169, %s172
    %p181 = scmp.eq.s32.totalorder %s17, 1
    %p182 = por %p180, %p181
    %p183 = scmp.ne.s32.totalorder %s172, %s173
    %p184 = scmp.eq.s32.totalorder %s17, 0
    %p185 = por %p183, %p184
    %p186 = scmp.ne.s32.totalorder %s172, %s173
    %p187 = scmp.eq.s32.totalorder %s18, 1
    %p188 = por %p186, %p187
    %p190 = scmp.ne.s32.totalorder %s173, %s189
    %p191 = scmp.eq.s32.totalorder %s18, 0
    %p192 = por %p190, %p191
    %p193 = scmp.le.s32.totalorder 1, %s12
    %p194 = scmp.lt.s32.totalorder %s12, 3
    %p195 = pnand %p193, %p194
    %p196 = pneg %p195
    // Predicated region
    $region9: #{point_classifier_forward.1} parent=5 // pred_check
      _
    $region10: #{point_classifier_forward.1} parent=5 // pred_check_branch
      %198 = sbr.rel (%p195) target = $region12
    $region11: #{point_classifier_forward.1} parent=5 // pred_region
      %s199 = ssub.s32 %s12, 1
      // Predicated region
      $region13: #{point_classifier_forward.1} parent=11 // pred_check
        %p200 = pneg %p73
      $region14: #{point_classifier_forward.1} parent=11 // pred_check_branch
        %202 = sbr.rel (%p200) target = $region16
      $region15: #{point_classifier_forward.1} parent=11 // pred_region
        _
      $region16: #{point_classifier_forward.1} parent=11 // pred_fallthru
        _
      // Predicated region
      $region17: #{point_classifier_forward.1} parent=11 // pred_check
        %p203 = pneg %p94
      $region18: #{point_classifier_forward.1} parent=11 // pred_check_branch
        %205 = sbr.rel (%p203) target = $region20
      $region19: #{point_classifier_forward.1} parent=11 // pred_region
        _
      $region20: #{point_classifier_forward.1} parent=11 // pred_fallthru
        _
      // Predicated region
      $region21: #{point_classifier_forward.1} parent=11 // pred_check
        %p206 = pneg %p115
      $region22: #{point_classifier_forward.1} parent=11 // pred_check_branch
        %208 = sbr.rel (%p206) target = $region24
      $region23: #{point_classifier_forward.1} parent=11 // pred_region
        _
      $region24: #{point_classifier_forward.1} parent=11 // pred_fallthru
        _
      // Predicated region
      $region25: #{point_classifier_forward.1} parent=11 // pred_check
        %p209 = pneg %p136
      $region26: #{point_classifier_forward.1} parent=11 // pred_check_branch
        %211 = sbr.rel (%p209) target = $region28
      $region27: #{point_classifier_forward.1} parent=11 // pred_region
        _
      $region28: #{point_classifier_forward.1} parent=11 // pred_fallthru
        _
      // Predicated region
      $region29: #{point_classifier_forward.1} parent=11 // pred_check
        %p212 = pneg %p157
      $region30: #{point_classifier_forward.1} parent=11 // pred_check_branch
        %214 = sbr.rel (%p212) target = $region32
      $region31: #{point_classifier_forward.1} parent=11 // pred_region
        _
      $region32: #{point_classifier_forward.1} parent=11 // pred_fallthru
        _
    $region12: #{point_classifier_forward.1} parent=5 // pred_fallthru
      _
    %p215 = scmp.lt.s32.totalorder %s12, 2
    // Predicated region
    $region33: #{point_classifier_forward.1} parent=5 // pred_check
      %p216 = pneg %p215
    $region34: #{point_classifier_forward.1} parent=5 // pred_check_branch
      %218 = sbr.rel (%p216) target = $region36
    $region35: #{point_classifier_forward.1} parent=5 // pred_region
      // Predicated region
      $region37: #{point_classifier_forward.1} parent=35 // pred_check
        %p219 = pneg %p46
      $region38: #{point_classifier_forward.1} parent=35 // pred_check_branch
        %221 = sbr.rel (%p219) target = $region40
      $region39: #{point_classifier_forward.1} parent=35 // pred_region
        %s222 = smul.u32 2, %s20
        %p223 = scmp.lt.s32.totalorder %s19, 1
        %s224 = scalar_select %p223, %s19, 1
        %p225 = scmp.lt.s32.totalorder %s222, 1
        %s226 = scalar_select %p225, %s222, 1
        %s227 = smul.addr %s224, 2
        %s228 = sadd.s32 %s226, %s227
        %s229 = smul.addr %s228, 4
        %s230 = scalar_lea.vmem %s0, %s229
        %s231 = smul.u32 2, %s20
      $region40: #{point_classifier_forward.1} parent=35 // pred_fallthru
        _
    $region36: #{point_classifier_forward.1} parent=5 // pred_fallthru
      _
    %p232 = scmp.le.s32.totalorder 1, %s12
    %p233 = scmp.lt.s32.totalorder %s12, 3
    %p234 = pnand %p232, %p233
    %p235 = pneg %p234
    // Predicated region
    $region41: #{point_classifier_forward.1} parent=5 // pred_check
      _
    $region42: #{point_classifier_forward.1} parent=5 // pred_check_branch
      %237 = sbr.rel (%p234) target = $region44
    $region43: #{point_classifier_forward.1} parent=5 // pred_region
      %s238 = ssub.s32 %s12, 1
      %s239 = smul.u32 2, %s22
      %p240 = scmp.lt.s32.totalorder %s21, 1
      %s241 = scalar_select %p240, %s21, 1
      %p242 = scmp.lt.s32.totalorder %s239, 1
      %s243 = scalar_select %p242, %s239, 1
      %s244 = smul.addr %s241, 2
      %s245 = sadd.s32 %s243, %s244
      %s246 = smul.addr %s245, 4
      %s247 = scalar_lea.vmem %s0, %s246
      %p248 = pneg %p52
      %p249 = pneg %p49
      %p250 = pneg %p73
      %p251 = pneg %p70
      %p252 = pneg %p94
      %p253 = pneg %p91
      %p254 = pneg %p115
      %p255 = pneg %p112
      %p256 = pneg %p136
      %p257 = pneg %p133
      %p258 = pneg %p157
      %p259 = pneg %p154
      %p260 = pneg %p185
      %p261 = pneg %p182
      %s262 = smul.u32 2, %s22
      %p263 = scmp.lt.s32.totalorder %s21, 1
      %s264 = scalar_select %p263, %s21, 1
      %p265 = scmp.lt.s32.totalorder %s262, 1
      %s266 = scalar_select %p265, %s262, 1
      %s267 = smul.addr %s264, 2
      %s268 = sadd.s32 %s266, %s267
      %s269 = smul.addr %s268, 8
      %s270 = scalar_lea.vmem %s6, %s269
      %s271 = smul.u32 2, %s22
      %p272 = scmp.lt.s32.totalorder %s21, 1
      %s273 = scalar_select %p272, %s21, 1
      %p274 = scmp.lt.s32.totalorder %s271, 1
      %s275 = scalar_select %p274, %s271, 1
      %s276 = smul.addr %s273, 2
      %s277 = sadd.s32 %s275, %s276
      %s278 = smul.addr %s277, 4
      %s279 = scalar_lea.vmem %s0, %s278
      %s280 = smul.u32 2, %s22
      %s281 = smul.u32 2, %s22
      %p282 = scmp.lt.s32.totalorder %s21, 1
      %s283 = scalar_select %p282, %s21, 1
      %p284 = scmp.lt.s32.totalorder %s281, 1
      %s285 = scalar_select %p284, %s281, 1
      %s286 = smul.addr %s283, 2
      %s287 = sadd.s32 %s285, %s286
      %s288 = smul.addr %s287, 8
      %s289 = scalar_lea.vmem %s6, %s288
      %s290 = smul.u32 2, %s22
      %v291 = vld [vmem:[%s279] sm:$0xff]
      %v292 = vld [vmem:[%s1] sm:$0xff]
      %v293 = vld [vmem:[%s1 + $0x8] sm:$0xff]
      %v294 = vld [vmem:[%s1 + $0x10] sm:$0xff]
      %v295 = vld [vmem:[%s1 + $0x18] sm:$0xff]
      %v296 = vld [vmem:[%s2] sm:$0xff]
      %v297 = vld [vmem:[%s2 + $0x8] sm:$0xff]
      %v298 = vld [vmem:[%s2 + $0x10] sm:$0xff]
      %v299 = vld [vmem:[%s2 + $0x18] sm:$0xff]
      %301 = vset.pattern.permute.xlu0 0
      %302 = vperm.xlu0 %301, %v296
      %v303 = vpop.permute.xlu0 %302
      %306 = vset.pattern.permute.xlu0 0
      %307 = vperm.xlu0 %306, %v297
      %v308 = vpop.permute.xlu0 %307
      %311 = vset.pattern.permute.xlu0 0
      %312 = vperm.xlu0 %311, %v298
      %v313 = vpop.permute.xlu0 %312
      %316 = vset.pattern.permute.xlu0 0
      %317 = vperm.xlu0 %316, %v299
      %v318 = vpop.permute.xlu0 %317
      %v321 = vcombine.high %v291, %v291
      %vm322 = vcmask 31744
      %v324 = vsel %vm322, %v292, 0
      %v327 = vsel %vm322, %v293, 0
      %v330 = vsel %vm322, %v294, 0
      %v333 = vsel %vm322, %v295, 0
      %vm335 = vcmask 1043456
      %v336 = vsel %vm335, %v291, 0
      %v338 = vsel %vm335, %v321, 0
      %340 = vmatprep.subr.mxu0 %v338
      %341 = vmatpush1.msra.mxu0 %v336
      %342 = vmatprep.subr.mxu0 0.0
      %343 = vmatpush1.msra.mxu0 0.0
      %344 = vmatprep.subr.mxu0 0.0
      %345 = vmatpush1.msra.mxu0 0.0
      %346 = vmatprep.subr.mxu0 0.0
      %347 = vmatpush1.msra.mxu0 0.0
      %348 = vmatprep.subr.mxu0 0.0
      %349 = vmatpush1.msra.mxu0 0.0
      %350 = vmatprep.subr.mxu0 0.0
      %351 = vmatpush1.msra.mxu0 0.0
      %352 = vmatprep.subr.mxu0 0.0
      %353 = vmatpush1.msra.mxu0 0.0
      %354 = vmatprep.subr.mxu0 0.0
      %355 = vmatpush1.msra.mxu0 0.0
      %356 = vmatprep.subr.mxu0 0.0
      %357 = vmatpush1.msra.mxu0 0.0
      %358 = vmatprep.subr.mxu0 0.0
      %359 = vmatpush1.msra.mxu0 0.0
      %360 = vmatprep.subr.mxu0 0.0
      %361 = vmatpush1.msra.mxu0 0.0
      %362 = vmatprep.subr.mxu0 0.0
      %363 = vmatpush1.msra.mxu0 0.0
      %364 = vmatprep.subr.mxu0 0.0
      %365 = vmatpush1.msra.mxu0 0.0
      %366 = vmatprep.subr.mxu0 0.0
      %367 = vmatpush1.msra.mxu0 0.0
      %368 = vmatprep.subr.mxu0 0.0
      %369 = vmatpush1.msra.mxu0 0.0
      %370 = vmatprep.subr.mxu0 0.0
      %371 = vmatpush1.msra.mxu0 0.0
      %372 = vmatprep.subr.mxu0 0.0
      %373 = vmatpush1.msra.mxu0 0.0
      %374 = vmatprep.subr.mxu0 0.0
      %375 = vmatpush1.msra.mxu0 0.0
      %376 = vmatprep.subr.mxu0 0.0
      %377 = vmatpush1.msra.mxu0 0.0
      %378 = vmatprep.subr.mxu0 0.0
      %379 = vmatpush1.msra.mxu0 0.0
      %380 = vmatprep.subr.mxu0 0.0
      %381 = vmatpush1.msra.mxu0 0.0
      %382 = vmatprep.subr.mxu0 0.0
      %383 = vmatpush1.msra.mxu0 0.0
      %384 = vmatprep.subr.mxu0 0.0
      %385 = vmatpush1.msra.mxu0 0.0
      %386 = vmatprep.subr.mxu0 0.0
      %387 = vmatpush1.msra.mxu0 0.0
      %388 = vmatprep.subr.mxu0 0.0
      %389 = vmatpush1.msra.mxu0 0.0
      %390 = vmatprep.subr.mxu0 0.0
      %391 = vmatpush1.msra.mxu0 0.0
      %392 = vmatprep.subr.mxu0 0.0
      %393 = vmatpush1.msra.mxu0 0.0
      %394 = vmatprep.subr.mxu0 0.0
      %395 = vmatpush1.msra.mxu0 0.0
      %396 = vmatprep.subr.mxu0 0.0
      %397 = vmatpush1.msra.mxu0 0.0
      %398 = vmatprep.subr.mxu0 0.0
      %399 = vmatpush1.msra.mxu0 0.0
      %400 = vmatprep.subr.mxu0 0.0
      %401 = vmatpush1.msra.mxu0 0.0
      %402 = vmatprep.subr.mxu0 0.0
      %403 = vmatpush1.msra.mxu0 0.0
      %404 = vmatprep.mubr.f32.mxu0 0.0
      %405 = vmatmul.mubr.f32.gmra.mrb[0].mxu0 %v324
      %v406 = vpop.f32.mrb[0].mxu0
      %v407 = vadd.f32 %v303, %v406
      %v408 = vpop.f32.mrb[0].mxu0
      %v409 = vadd.f32 %v303, %v408
      %410 = vmatprep.mubr.f32.mxu0 0.0
      %411 = vmatmul.mubr.f32.gmra.mrb[0].mxu0 %v327
      %v412 = vpop.f32.mrb[0].mxu0
      %v413 = vadd.f32 %v308, %v412
      %v414 = vpop.f32.mrb[0].mxu0
      %v415 = vadd.f32 %v308, %v414
      %416 = vmatprep.mubr.f32.mxu0 0.0
      %417 = vmatmul.mubr.f32.gmra.mrb[0].mxu0 %v330
      %v418 = vpop.f32.mrb[0].mxu0
      %v419 = vadd.f32 %v313, %v418
      %v420 = vpop.f32.mrb[0].mxu0
      %v421 = vadd.f32 %v313, %v420
      %422 = vmatprep.mubr.f32.mxu0 0.0
      %423 = vmatmul.mubr.f32.gmra.mrb[0].mxu0 %v333
      %v424 = vpop.f32.mrb[0].mxu0
      %v425 = vadd.f32 %v318, %v424
      %v426 = vpop.f32.mrb[0].mxu0
      %v427 = vadd.f32 %v318, %v426
      %428 = vdwg.mxu0
      %vm429 = vcmp.gt.f32.partialorder %v407, 0.0
      %vm430 = vcmp.gt.f32.partialorder %v409, 0.0
      %vm431 = vcmp.gt.f32.partialorder %v413, 0.0
      %vm432 = vcmp.gt.f32.partialorder %v415, 0.0
      %vm433 = vcmp.gt.f32.partialorder %v419, 0.0
      %vm434 = vcmp.gt.f32.partialorder %v421, 0.0
      %vm435 = vcmp.gt.f32.partialorder %v425, 0.0
      %vm436 = vcmp.gt.f32.partialorder %v427, 0.0
      %v437 = vmul.f32 %v407, 0.1
      %v438 = vmul.f32 %v409, 0.1
      %v439 = vmul.f32 %v413, 0.1
      %v440 = vmul.f32 %v415, 0.1
      %v441 = vmul.f32 %v419, 0.1
      %v442 = vmul.f32 %v421, 0.1
      %v443 = vmul.f32 %v425, 0.1
      %v444 = vmul.f32 %v427, 0.1
      %v445 = vsel %vm429, %v407, %v437
      %v446 = vsel %vm430, %v409, %v438
      %v447 = vsel %vm431, %v413, %v439
      %v448 = vsel %vm432, %v415, %v440
      %v449 = vsel %vm433, %v419, %v441
      %v450 = vsel %vm434, %v421, %v442
      %v451 = vsel %vm435, %v425, %v443
      %v452 = vsel %vm436, %v427, %v444
      %v453 = vld [vmem:[%s3] sm:$0xff]
      %v454 = vld [vmem:[%s3 + $0x8] sm:$0xff]
      %v455 = vld [vmem:[%s3 + $0x10] sm:$0xff]
      %v456 = vld [vmem:[%s3 + $0x18] sm:$0xff]
      %v457 = vld [vmem:[%s4] sm:$0xff]
      %v458 = vld [vmem:[%s4 + $0x8] sm:$0xff]
      %v459 = vld [vmem:[%s4 + $0x10] sm:$0xff]
      %v460 = vld [vmem:[%s4 + $0x18] sm:$0xff]
      %462 = vset.pattern.permute.xlu0 0
      %463 = vperm.xlu0 %462, %v457
      %v464 = vpop.permute.xlu0 %463
      %467 = vset.pattern.permute.xlu0 0
      %468 = vperm.xlu0 %467, %v458
      %v469 = vpop.permute.xlu0 %468
      %472 = vset.pattern.permute.xlu0 0
      %473 = vperm.xlu0 %472, %v459
      %v474 = vpop.permute.xlu0 %473
      %477 = vset.pattern.permute.xlu0 0
      %478 = vperm.xlu0 %477, %v460
      %v479 = vpop.permute.xlu0 %478
      %vm481 = vcmask 261120
      %v483 = vsel %vm481, %v453, 0
      %v486 = vsel %vm481, %v454, 0
      %v489 = vsel %vm481, %v455, 0
      %v492 = vsel %vm481, %v456, 0
      %494 = vmatprep.subr.mxu0 %v446
      %495 = vmatpush1.msra.mxu0 %v445
      %496 = vmatprep.subr.mxu0 %v448
      %497 = vmatpush1.msra.mxu0 %v447
      %498 = vmatprep.subr.mxu0 %v450
      %499 = vmatpush1.msra.mxu0 %v449
      %500 = vmatprep.subr.mxu0 %v452
      %501 = vmatpush1.msra.mxu0 %v451
      %502 = vmatprep.subr.mxu0 0.0
      %503 = vmatpush1.msra.mxu0 0.0
      %504 = vmatprep.subr.mxu0 0.0
      %505 = vmatpush1.msra.mxu0 0.0
      %506 = vmatprep.subr.mxu0 0.0
      %507 = vmatpush1.msra.mxu0 0.0
      %508 = vmatprep.subr.mxu0 0.0
      %509 = vmatpush1.msra.mxu0 0.0
      %510 = vmatprep.subr.mxu0 0.0
      %511 = vmatpush1.msra.mxu0 0.0
      %512 = vmatprep.subr.mxu0 0.0
      %513 = vmatpush1.msra.mxu0 0.0
      %514 = vmatprep.subr.mxu0 0.0
      %515 = vmatpush1.msra.mxu0 0.0
      %516 = vmatprep.subr.mxu0 0.0
      %517 = vmatpush1.msra.mxu0 0.0
      %518 = vmatprep.subr.mxu0 0.0
      %519 = vmatpush1.msra.mxu0 0.0
      %520 = vmatprep.subr.mxu0 0.0
      %521 = vmatpush1.msra.mxu0 0.0
      %522 = vmatprep.subr.mxu0 0.0
      %523 = vmatpush1.msra.mxu0 0.0
      %524 = vmatprep.subr.mxu0 0.0
      %525 = vmatpush1.msra.mxu0 0.0
      %526 = vmatprep.subr.mxu0 0.0
      %527 = vmatpush1.msra.mxu0 0.0
      %528 = vmatprep.subr.mxu0 0.0
      %529 = vmatpush1.msra.mxu0 0.0
      %530 = vmatprep.subr.mxu0 0.0
      %531 = vmatpush1.msra.mxu0 0.0
      %532 = vmatprep.subr.mxu0 0.0
      %533 = vmatpush1.msra.mxu0 0.0
      %534 = vmatprep.subr.mxu0 0.0
      %535 = vmatpush1.msra.mxu0 0.0
      %536 = vmatprep.subr.mxu0 0.0
      %537 = vmatpush1.msra.mxu0 0.0
      %538 = vmatprep.subr.mxu0 0.0
      %539 = vmatpush1.msra.mxu0 0.0
      %540 = vmatprep.subr.mxu0 0.0
      %541 = vmatpush1.msra.mxu0 0.0
      %542 = vmatprep.subr.mxu0 0.0
      %543 = vmatpush1.msra.mxu0 0.0
      %544 = vmatprep.subr.mxu0 0.0
      %545 = vmatpush1.msra.mxu0 0.0
      %546 = vmatprep.subr.mxu0 0.0
      %547 = vmatpush1.msra.mxu0 0.0
      %548 = vmatprep.subr.mxu0 0.0
      %549 = vmatpush1.msra.mxu0 0.0
      %550 = vmatprep.subr.mxu0 0.0
      %551 = vmatpush1.msra.mxu0 0.0
      %552 = vmatprep.subr.mxu0 0.0
      %553 = vmatpush1.msra.mxu0 0.0
      %554 = vmatprep.subr.mxu0 0.0
      %555 = vmatpush1.msra.mxu0 0.0
      %556 = vmatprep.subr.mxu0 0.0
      %557 = vmatpush1.msra.mxu0 0.0
      %558 = vmatprep.mubr.f32.mxu0 0.0
      %559 = vmatmul.mubr.f32.gmra.mrb[0].mxu0 %v483
      %v560 = vpop.f32.mrb[0].mxu0
      %v561 = vadd.f32 %v464, %v560
      %v562 = vpop.f32.mrb[0].mxu0
      %v563 = vadd.f32 %v464, %v562
      %564 = vmatprep.mubr.f32.mxu0 0.0
      %565 = vmatmul.mubr.f32.gmra.mrb[0].mxu0 %v486
      %v566 = vpop.f32.mrb[0].mxu0
      %v567 = vadd.f32 %v469, %v566
      %v568 = vpop.f32.mrb[0].mxu0
      %v569 = vadd.f32 %v469, %v568
      %570 = vmatprep.mubr.f32.mxu0 0.0
      %571 = vmatmul.mubr.f32.gmra.mrb[0].mxu0 %v489
      %v572 = vpop.f32.mrb[0].mxu0
      %v573 = vadd.f32 %v474, %v572
      %v574 = vpop.f32.mrb[0].mxu0
      %v575 = vadd.f32 %v474, %v574
      %576 = vmatprep.mubr.f32.mxu0 0.0
      %577 = vmatmul.mubr.f32.gmra.mrb[0].mxu0 %v492
      %v578 = vpop.f32.mrb[0].mxu0
      %v579 = vadd.f32 %v479, %v578
      %v580 = vpop.f32.mrb[0].mxu0
      %v581 = vadd.f32 %v479, %v580
      %582 = vdwg.mxu0
      %vm583 = vcmp.gt.f32.partialorder %v561, 0.0
      %vm584 = vcmp.gt.f32.partialorder %v563, 0.0
      %vm585 = vcmp.gt.f32.partialorder %v567, 0.0
      %vm586 = vcmp.gt.f32.partialorder %v569, 0.0
      %vm587 = vcmp.gt.f32.partialorder %v573, 0.0
      %vm588 = vcmp.gt.f32.partialorder %v575, 0.0
      %vm589 = vcmp.gt.f32.partialorder %v579, 0.0
      %vm590 = vcmp.gt.f32.partialorder %v581, 0.0
      %v591 = vmul.f32 %v561, 0.1
      %v592 = vmul.f32 %v563, 0.1
      %v593 = vmul.f32 %v567, 0.1
      %v594 = vmul.f32 %v569, 0.1
      %v595 = vmul.f32 %v573, 0.1
      %v596 = vmul.f32 %v575, 0.1
      %v597 = vmul.f32 %v579, 0.1
      %v598 = vmul.f32 %v581, 0.1
      %v599 = vsel %vm583, %v561, %v591
      %v600 = vsel %vm584, %v563, %v592
      %v601 = vsel %vm585, %v567, %v593
      %v602 = vsel %vm586, %v569, %v594
      %v603 = vsel %vm587, %v573, %v595
      %v604 = vsel %vm588, %v575, %v596
      %v605 = vsel %vm589, %v579, %v597
      %v606 = vsel %vm590, %v581, %v598
      %v607 = vld [vmem:[%s5] sm:$0x1f]
      %v609 = vsel %vm481, %v607, 0
      %611 = vmatprep.subr.mxu0 %v600
      %612 = vmatpush1.msra.mxu0 %v599
      %613 = vmatprep.subr.mxu0 %v602
      %614 = vmatpush1.msra.mxu0 %v601
      %615 = vmatprep.subr.mxu0 %v604
      %616 = vmatpush1.msra.mxu0 %v603
      %617 = vmatprep.subr.mxu0 %v606
      %618 = vmatpush1.msra.mxu0 %v605
      %619 = vmatprep.subr.mxu0 0.0
      %620 = vmatpush1.msra.mxu0 0.0
      %621 = vmatprep.subr.mxu0 0.0
      %622 = vmatpush1.msra.mxu0 0.0
      %623 = vmatprep.subr.mxu0 0.0
      %624 = vmatpush1.msra.mxu0 0.0
      %625 = vmatprep.subr.mxu0 0.0
      %626 = vmatpush1.msra.mxu0 0.0
      %627 = vmatprep.subr.mxu0 0.0
      %628 = vmatpush1.msra.mxu0 0.0
      %629 = vmatprep.subr.mxu0 0.0
      %630 = vmatpush1.msra.mxu0 0.0
      %631 = vmatprep.subr.mxu0 0.0
      %632 = vmatpush1.msra.mxu0 0.0
      %633 = vmatprep.subr.mxu0 0.0
      %634 = vmatpush1.msra.mxu0 0.0
      %635 = vmatprep.subr.mxu0 0.0
      %636 = vmatpush1.msra.mxu0 0.0
      %637 = vmatprep.subr.mxu0 0.0
      %638 = vmatpush1.msra.mxu0 0.0
      %639 = vmatprep.subr.mxu0 0.0
      %640 = vmatpush1.msra.mxu0 0.0
      %641 = vmatprep.subr.mxu0 0.0
      %642 = vmatpush1.msra.mxu0 0.0
      %643 = vmatprep.subr.mxu0 0.0
      %644 = vmatpush1.msra.mxu0 0.0
      %645 = vmatprep.subr.mxu0 0.0
      %646 = vmatpush1.msra.mxu0 0.0
      %647 = vmatprep.subr.mxu0 0.0
      %648 = vmatpush1.msra.mxu0 0.0
      %649 = vmatprep.subr.mxu0 0.0
      %650 = vmatpush1.msra.mxu0 0.0
      %651 = vmatprep.subr.mxu0 0.0
      %652 = vmatpush1.msra.mxu0 0.0
      %653 = vmatprep.subr.mxu0 0.0
      %654 = vmatpush1.msra.mxu0 0.0
      %655 = vmatprep.subr.mxu0 0.0
      %656 = vmatpush1.msra.mxu0 0.0
      %657 = vmatprep.subr.mxu0 0.0
      %658 = vmatpush1.msra.mxu0 0.0
      %659 = vmatprep.subr.mxu0 0.0
      %660 = vmatpush1.msra.mxu0 0.0
      %661 = vmatprep.subr.mxu0 0.0
      %662 = vmatpush1.msra.mxu0 0.0
      %663 = vmatprep.subr.mxu0 0.0
      %664 = vmatpush1.msra.mxu0 0.0
      %665 = vmatprep.subr.mxu0 0.0
      %666 = vmatpush1.msra.mxu0 0.0
      %667 = vmatprep.subr.mxu0 0.0
      %668 = vmatpush1.msra.mxu0 0.0
      %669 = vmatprep.subr.mxu0 0.0
      %670 = vmatpush1.msra.mxu0 0.0
      %671 = vmatprep.subr.mxu0 0.0
      %672 = vmatpush1.msra.mxu0 0.0
      %673 = vmatprep.subr.mxu0 0.0
      %674 = vmatpush1.msra.mxu0 0.0
      %675 = vmatprep.mubr.f32.mxu0 0.0
      %676 = vmatmul.mubr.f32.gmra.mrb[0].mxu0 %v609
      %v677 = vpop.f32.mrb[0].mxu0
      %v678 = vadd.f32 0.0, %v677
      %v679 = vpop.f32.mrb[0].mxu0
      %v680 = vadd.f32 0.0, %v679
      %681 = vdwg.mxu0
      %682 = vst [vmem:[%s289] sm:$0x1f] %v678
      %683 = vst [vmem:[%s289 + $0x8] sm:$0x1f] %v680
      %s684 = smul.u32 2, %s22
      %p685 = scmp.lt.s32.totalorder %s21, 1
      %s686 = scalar_select %p685, %s21, 1
      %p687 = scmp.lt.s32.totalorder %s684, 1
      %s688 = scalar_select %p687, %s684, 1
      %s689 = smul.addr %s686, 2
      %s690 = sadd.s32 %s688, %s689
      %s691 = smul.addr %s690, 8
      %s692 = scalar_lea.vmem %s6, %s691
      // Predicated region
      $region45: #{point_classifier_forward.1} parent=43 // pred_check
        %p693 = pneg %p182
      $region46: #{point_classifier_forward.1} parent=43 // pred_check_branch
        %695 = sbr.rel (%p693) target = $region48
      $region47: #{point_classifier_forward.1} parent=43 // pred_region
        %s696 = smul.u32 2, %s22
      $region48: #{point_classifier_forward.1} parent=43 // pred_fallthru
        _
    $region44: #{point_classifier_forward.1} parent=5 // pred_fallthru
      _
    %p697 = scmp.le.s32.totalorder 2, %s12
    // Predicated region
    $region49: #{point_classifier_forward.1} parent=5 // pred_check
      %p698 = pneg %p697
    $region50: #{point_classifier_forward.1} parent=5 // pred_check_branch
      %700 = sbr.rel (%p698) target = $region52
    $region51: #{point_classifier_forward.1} parent=5 // pred_region
      %s701 = ssub.s32 %s12, 2
      // Predicated region
      $region53: #{point_classifier_forward.1} parent=51 // pred_check
        %p702 = pneg %p188
      $region54: #{point_classifier_forward.1} parent=51 // pred_check_branch
        %704 = sbr.rel (%p702) target = $region56
      $region55: #{point_classifier_forward.1} parent=51 // pred_region
        %s705 = smul.u32 2, %s24
        %p706 = scmp.lt.s32.totalorder %s23, 1
        %s707 = scalar_select %p706, %s23, 1
        %p708 = scmp.lt.s32.totalorder %s705, 1
        %s709 = scalar_select %p708, %s705, 1
        %s710 = smul.addr %s707, 2
        %s711 = sadd.s32 %s709, %s710
        %s712 = smul.addr %s711, 8
        %s713 = scalar_lea.vmem %s6, %s712
      $region56: #{point_classifier_forward.1} parent=51 // pred_fallthru
        _
    $region52: #{point_classifier_forward.1} parent=5 // pred_fallthru
      _
  $region6: #{point_classifier_forward.1} parent=0 // loop_footer
    %s16 = sadd.s32 1, %s12
  $region7: #{point_classifier_forward.1} parent=0 // loop_footer_branch
    %11 = sbr.rel target = $region3
  $region8: #{point_classifier_forward.1} parent=0 // loop_exit
    _

</llo_original>
